<compile_context>
chip_gen: v5e
topology: v5e:2x2
jax: 0.10.0
libtpu: 0.0.40
codegen_flags: <defaults>
</compile_context>

<pallas_src>
import functools

import jax
import jax.numpy as jnp
from jax.experimental import pallas as pl
from jax.experimental.pallas import tpu as pltpu


def _dec_kernel(z_ref, ct_ref, csq_ref, q_ref, *, alpha: float, k_valid: int):
    # z_ref:   (bn, D)      tile of latent vectors (any float dtype, cast below)
    # ct_ref:  (D, K_pad)   clusters, pre-transposed, grid-invariant resident tile
    # csq_ref: (1, K_pad)   ||c_k||^2, padded entries poisoned with 1e30
    # q_ref:   (bn, K)      unpadded output tile
    z = z_ref[...].astype(jnp.float32)                         # (bn, D)
    z_sq = jnp.sum(z * z, axis=-1, keepdims=True)              # (bn, 1)

    # MXU matmul: (bn, D) x (D, K_pad) -> (bn, K_pad)
    zc = jnp.dot(z, ct_ref[...], preferred_element_type=jnp.float32)

    # Gram identity; clamp tiny negatives from cancellation.  Poisoned padded
    # columns get dist2 ~ 1e30 -> q ~ 0, so no explicit mask is needed.
    dist2 = jnp.maximum(z_sq + csq_ref[...] - 2.0 * zc, 0.0)   # (bn, K_pad)

    if alpha == 1.0:
        # Student-t kernel; the pow is the identity.  EUP approx reciprocal sits
        # in its own VLIW slot -> effectively free on this HBM-bound kernel.
        q = pl.reciprocal(1.0 + dist2, approx=True)
    else:
        # 2 transcendentals per element, no approx-error amplification by pow.
        q = jnp.exp((-(alpha + 1.0) / 2.0) * jnp.log1p(dist2 * (1.0 / alpha)))

    # Row-normalize over clusters: exact divide on the (bn, 1) denominator is
    # essentially free and makes rows sum to 1 at f32 accuracy.
    q = q / jnp.sum(q, axis=-1, keepdims=True)

    # Store only the real K columns (write-byte-minimal output).
    q_ref[...] = q[:, :k_valid].astype(q_ref.dtype)


def _round_up(x: int, m: int) -> int:
    return ((x + m - 1) // m) * m


def _pick_block_n(n_pad8: int, block_n: int) -> int:
    """Largest multiple-of-8 divisor of n_pad8 that is <= block_n, preferring a
    divisor that yields >= 2 grid steps (keeps both v7x TensorCores busy)."""
    cap = min(block_n, n_pad8)
    cap -= cap % 8
    single_step = None
    for bn in range(max(cap, 8), 7, -8):
        if n_pad8 % bn == 0:
            if n_pad8 // bn >= 2:
                return bn
            if single_step is None:
                single_step = bn
    return single_step if single_step is not None else 8


def dec_layer(z: jax.Array, clusters: jax.Array, alpha: float = 1.0,
              block_n: int = 512, out_dtype=jnp.float32) -> jax.Array:
    """Pallas implementation of DECLayer.forward.

    z:        (N, D) latent vectors (f32 or bf16; cast to f32 inside the kernel)
    clusters: (K, D) cluster centers
    returns:  (N, K) soft assignments (rows sum to 1), dtype `out_dtype`
              (pass out_dtype=jnp.bfloat16 to halve output writeback bytes).
    """
    N, D = z.shape
    K, D2 = clusters.shape
    assert D == D2

    # Lane-dense compute width (multiple of 128); output stays at the real K.
    K_pad = _round_up(K, 128)

    # Pad N only to a sublane multiple (<= 7 extra rows) and pick bn as a
    # divisor of the padded N -> no full-array pad copy through HBM.
    N_pad = _round_up(N, 8)
    if N_pad != N:
        z = jnp.pad(z, ((0, N_pad - N), (0, 0)))
    bn = _pick_block_n(N_pad, block_n)

    # Hoist grid-invariant cluster work: f32 cast, pad, transpose, squared
    # norms.  Padded ||c||^2 entries carry a large finite poison so padded
    # columns vanish from the in-kernel row sums without any masking.
    c32 = clusters.astype(jnp.float32)
    c_t = jnp.pad(c32, ((0, K_pad - K), (0, 0))).T                 # (D, K_pad)
    c_sq = jnp.pad(jnp.sum(c32 * c32, axis=-1), (0, K_pad - K),
                   constant_values=1e30)[None, :]                  # (1, K_pad)

    kernel = functools.partial(_dec_kernel, alpha=float(alpha), k_valid=K)

    in_size = jnp.dtype(z.dtype).itemsize
    out_size = jnp.dtype(out_dtype).itemsize
    # Double-buffered streamed tiles + resident cluster tiles, with headroom.
    tile_bytes = 2 * (bn * D * in_size + bn * K * out_size) + 4 * (D * K_pad + K_pad)
    vmem_limit = int(min(64 * 1024 * 1024, max(32 * 1024 * 1024, 4 * tile_bytes)))

    q = pl.pallas_call(
        kernel,
        out_shape=jax.ShapeDtypeStruct((N_pad, K), out_dtype),
        grid_spec=pltpu.PrefetchScalarGridSpec(
            num_scalar_prefetch=0,
            grid=(N_pad // bn,),
            in_specs=[
                pl.BlockSpec((bn, D), lambda i: (i, 0)),        # z tile (streamed)
                pl.BlockSpec((D, K_pad), lambda i: (0, 0)),     # clusters^T (resident)
                pl.BlockSpec((1, K_pad), lambda i: (0, 0)),     # ||c||^2   (resident)
            ],
            out_specs=pl.BlockSpec((bn, K), lambda i: (i, 0)),  # unpadded output
        ),
        compiler_params=pltpu.CompilerParams(
            dimension_semantics=("parallel",),
            vmem_limit_bytes=vmem_limit,
        ),
        cost_estimate=pl.CostEstimate(
            flops=2 * N_pad * K_pad * D + 6 * N_pad * K_pad,
            transcendentals=N_pad * K_pad,
            bytes_accessed=(N_pad * D * in_size + 4 * (K_pad * D + K_pad)
                            + N_pad * K * out_size),
        ),
    )(z, c_t, c_sq)

    return q if N_pad == N else q[:N]


def dec_layer_ref(z, clusters, alpha=1.0):
    """Plain-JAX reference mirroring the PyTorch forward exactly."""
    q = 1.0 / (1.0 + jnp.sum((z[:, None, :] - clusters[None, :, :]) ** 2, axis=2) / alpha)
    q = q ** ((alpha + 1.0) / 2.0)
    q = (q.T / jnp.sum(q, axis=1)).T
    return q


if __name__ == "__main__":
    # Small, deterministic shapes: N=64 samples, latent_dim=32, n_clusters=8.
    N, D, K = 64, 32, 8
    alpha = 1.0

    key = jax.random.PRNGKey(0)
    kz, kc = jax.random.split(key)
    z = jax.random.normal(kz, (N, D), dtype=jnp.float32)
    clusters = jax.random.normal(kc, (K, D), dtype=jnp.float32)  # nn.Parameter(torch.randn(K, D))

    q = jax.block_until_ready(dec_layer(z, clusters, alpha=alpha))
    q_ref = dec_layer_ref(z, clusters, alpha=alpha)

    assert q.shape == (N, K)
    # Element tolerance covers Gram-identity cancellation + EUP approx reciprocal.
    assert jnp.allclose(q, q_ref, atol=2e-3, rtol=2e-3), "mismatch vs reference"
    # Exact divide normalization -> rows sum to 1 at f32 accuracy.
    assert jnp.allclose(jnp.sum(q, axis=1), 1.0, atol=1e-4), "rows must sum to 1"

    print("KERNEL_OK")
</pallas_src>

<mosaic_0001>
module attributes {stable_mosaic.version = 11 : i64} {
  func.func @_dec_kernel(%arg0: i32, %arg1: memref<32x32xf32, #tpu.memory_space<vmem>>, %arg2: memref<32x128xf32, #tpu.memory_space<vmem>>, %arg3: memref<1x128xf32, #tpu.memory_space<vmem>>, %arg4: memref<32x8xf32, #tpu.memory_space<vmem>>) attributes {dimension_semantics = [#tpu.dimension_semantics<parallel>], iteration_bounds = array<i64: 2>, scalar_prefetch = 0 : i64, scratch_operands = 0 : i64, tpu.core_type = #tpu.core_type<tc>, window_params = [{transform_indices = @transform_0, window_bounds = array<i64: 32, 32>}, {pipeline_mode = #tpu.pipeline_mode<synchronous>, transform_indices = @transform_1, window_bounds = array<i64: 32, 128>}, {pipeline_mode = #tpu.pipeline_mode<synchronous>, transform_indices = @transform_2, window_bounds = array<i64: 1, 128>}, {transform_indices = @transform_3, window_bounds = array<i64: 32, 8>}]} {
    %c0 = arith.constant 0 : index
    %c0_0 = arith.constant 0 : index
    %0 = vector.load %arg1[%c0, %c0_0] : memref<32x32xf32, #tpu.memory_space<vmem>>, vector<32x32xf32>
    %1 = arith.mulf %0, %0 : vector<32x32xf32>
    %cst = arith.constant dense<0.000000e+00> : vector<32xf32>
    %2 = vector.multi_reduction <add>, %1, %cst [1] : vector<32x32xf32> to vector<32xf32>
    %3 = vector.shape_cast %2 : vector<32xf32> to vector<32x1xf32>
    %c0_1 = arith.constant 0 : index
    %c0_2 = arith.constant 0 : index
    %4 = vector.load %arg2[%c0_1, %c0_2] : memref<32x128xf32, #tpu.memory_space<vmem>>, vector<32x128xf32>
    %cst_3 = arith.constant dense<0.000000e+00> : vector<32x128xf32>
    %5 = tpu.matmul %0, %4, %cst_3 {dimension_numbers = #tpu.dot_dimension_numbers<[1], [0], [0], [1], [0, 0, 1, 1], [], []>} : vector<32x32xf32>, vector<32x128xf32>, vector<32x128xf32> -> vector<32x128xf32>
    %c0_4 = arith.constant 0 : index
    %c0_5 = arith.constant 0 : index
    %6 = vector.load %arg3[%c0_4, %c0_5] : memref<1x128xf32, #tpu.memory_space<vmem>>, vector<1x128xf32>
    %7 = vector.broadcast %3 : vector<32x1xf32> to vector<32x128xf32>
    %8 = vector.broadcast %6 : vector<1x128xf32> to vector<32x128xf32>
    %9 = arith.addf %7, %8 : vector<32x128xf32>
    %cst_6 = arith.constant 2.000000e+00 : f32
    %10 = vector.broadcast %cst_6 : f32 to vector<32x128xf32>
    %11 = arith.mulf %10, %5 : vector<32x128xf32>
    %12 = arith.subf %9, %11 : vector<32x128xf32>
    %cst_7 = arith.constant 0.000000e+00 : f32
    %13 = vector.broadcast %cst_7 : f32 to vector<32x128xf32>
    %14 = arith.maximumf %12, %13 : vector<32x128xf32>
    %cst_8 = arith.constant 1.000000e+00 : f32
    %15 = vector.broadcast %cst_8 : f32 to vector<32x128xf32>
    %16 = arith.addf %15, %14 : vector<32x128xf32>
    %17 = tpu.reciprocal %16 {approx = true} : vector<32x128xf32> -> vector<32x128xf32>
    %cst_9 = arith.constant dense<0.000000e+00> : vector<32xf32>
    %18 = vector.multi_reduction <add>, %17, %cst_9 [1] : vector<32x128xf32> to vector<32xf32>
    %19 = vector.shape_cast %18 : vector<32xf32> to vector<32x1xf32>
    %20 = vector.broadcast %19 : vector<32x1xf32> to vector<32x128xf32>
    %21 = arith.divf %17, %20 : vector<32x128xf32>
    %22 = vector.extract_strided_slice %21 {offsets = [0, 0], sizes = [32, 8], strides = [1, 1]} : vector<32x128xf32> to vector<32x8xf32>
    %c0_10 = arith.constant 0 : index
    %c0_11 = arith.constant 0 : index
    %23 = vector.load %arg4[%c0_10, %c0_11] : memref<32x8xf32, #tpu.memory_space<vmem>>, vector<32x8xf32>
    tpu.vector_store %arg4[%c0_10, %c0_11], %22 {strides = array<i32>} : memref<32x8xf32, #tpu.memory_space<vmem>>, vector<32x8xf32>,
    return
  }
  func.func @transform_0(%arg0: i32) -> (i32, i32) {
    %c0_i32 = arith.constant 0 : i32
    %c0_i32_0 = arith.constant 0 : i32
    return %arg0, %c0_i32 : i32, i32
  }
  func.func @transform_1(%arg0: i32) -> (i32, i32) {
    %c0_i32 = arith.constant 0 : i32
    %c0_i32_0 = arith.constant 0 : i32
    %c0_i32_1 = arith.constant 0 : i32
    return %c0_i32, %c0_i32_0 : i32, i32
  }
  func.func @transform_2(%arg0: i32) -> (i32, i32) {
    %c0_i32 = arith.constant 0 : i32
    %c0_i32_0 = arith.constant 0 : i32
    %c0_i32_1 = arith.constant 0 : i32
    return %c0_i32, %c0_i32_0 : i32, i32
  }
  func.func @transform_3(%arg0: i32) -> (i32, i32) {
    %c0_i32 = arith.constant 0 : i32
    %c0_i32_0 = arith.constant 0 : i32
    return %arg0, %c0_i32 : i32, i32
  }
}

</mosaic_0001>

<llo_original>
// kernel: tpu_custom_call.1
$region0: #{tpu_custom_call.1}
  #allocation0 [shape = 'u32[]', space=smem, size = 0x4, offset = 0x4, fixed_abs, tag = 'smem constant byte address 0x4 - core index']
  #allocation1 [shape = 'u32[72,128]{1,0:T(1,128)}', space=vmem, size = 0x9000, scoped, tag = 'internal scratch']
  %s0 = inlined_call_operand.vmem [shape: f32[64,32], index: 0, kind: input, shape index: {}]
  %s1 = inlined_call_operand.vmem [shape: f32[32,128], index: 1, kind: input, shape index: {}]
  %s2 = inlined_call_operand.vmem [shape: f32[1,128], index: 2, kind: input, shape index: {}]
  %s3 = inlined_call_operand.vmem [shape: f32[64,8], index: 3, kind: output, shape index: {}]
  %s4 = sld [smem:[#allocation0]]
  $region45: #{tpu_custom_call.1} parent=0
    _
  %s6 = ssub.s32 1, %s4
  %s7 = scalar_select 0, %s6, %s4
  loop: start=0, step=1, limit=4
  $region2: #{tpu_custom_call.1} parent=0 // loop_pre_header
    _
  $region3: #{tpu_custom_call.1} parent=0 // loop_header
    %s9 = sphi 0, %s13
    %p10 = scmp.ge.s32.totalorder %s9, 4
    %s19 = sphi 0, %s21
    %s22 = sphi 0, %s19
    %s23 = sphi 0, %s22
    %s39 = sphi 0, %s23
    %s43 = sphi 0, %s43
    %s45 = sphi 0, %s43
    %s46 = sphi 0, %s45
    %s60 = sphi 0, %s46
    %s64 = sphi 0, %s64
    %s66 = sphi 0, %s64
    %s67 = sphi 0, %s66
    %s81 = sphi 0, %s67
    %s87 = sphi 0, %s89
    %s90 = sphi 0, %s87
    %s91 = sphi 0, %s90
    %s107 = sphi 0, %s91
  $region4: #{tpu_custom_call.1} parent=0 // loop_header_branch
    %12 = sbr.rel (%p10) target = $region8
  $region5: #{tpu_custom_call.1} parent=0 // loop_body
    %s14 = ssub.s32 %s9, 1
    %s15 = ssub.s32 %s9, 2
    %s16 = sadd.s32 %s9, 1
    %s17 = ssub.s32 %s9, %s16
    %p18 = scmp.eq.s32.totalorder %s17, 0
    %s20 = sadd.s32 %s19, 1
    %s21 = scalar_select %p18, %s19, %s20
    %p24 = pneg %p18
    %p25 = scmp.eq.s32.totalorder %s9, 1
    %p26 = por %p24, %p25
    %p27 = scmp.ne.s32.totalorder %s19, %s22
    %p28 = scmp.eq.s32.totalorder %s9, 0
    %p29 = por %p27, %p28
    %p30 = scmp.ne.s32.totalorder %s19, %s22
    %p31 = scmp.eq.s32.totalorder %s14, 1
    %p32 = por %p30, %p31
    %p33 = scmp.ne.s32.totalorder %s22, %s23
    %p34 = scmp.eq.s32.totalorder %s14, 0
    %p35 = por %p33, %p34
    %p36 = scmp.ne.s32.totalorder %s22, %s23
    %p37 = scmp.eq.s32.totalorder %s15, 1
    %p38 = por %p36, %p37
    %p40 = scmp.ne.s32.totalorder %s23, %s39
    %p41 = scmp.eq.s32.totalorder %s15, 0
    %p42 = por %p40, %p41
    %s44 = sadd.s32 %s43, 1
    %p47 = scmp.eq.s32.totalorder %s9, 1
    %p48 = scmp.ne.s32.totalorder %s43, %s45
    %p49 = scmp.eq.s32.totalorder %s9, 0
    %p50 = por %p48, %p49
    %p51 = scmp.ne.s32.totalorder %s43, %s45
    %p52 = scmp.eq.s32.totalorder %s14, 1
    %p53 = por %p51, %p52
    %p54 = scmp.ne.s32.totalorder %s45, %s46
    %p55 = scmp.eq.s32.totalorder %s14, 0
    %p56 = por %p54, %p55
    %p57 = scmp.ne.s32.totalorder %s45, %s46
    %p58 = scmp.eq.s32.totalorder %s15, 1
    %p59 = por %p57, %p58
    %p61 = scmp.ne.s32.totalorder %s46, %s60
    %p62 = scmp.eq.s32.totalorder %s15, 0
    %p63 = por %p61, %p62
    %s65 = sadd.s32 %s64, 1
    %p68 = scmp.eq.s32.totalorder %s9, 1
    %p69 = scmp.ne.s32.totalorder %s64, %s66
    %p70 = scmp.eq.s32.totalorder %s9, 0
    %p71 = por %p69, %p70
    %p72 = scmp.ne.s32.totalorder %s64, %s66
    %p73 = scmp.eq.s32.totalorder %s14, 1
    %p74 = por %p72, %p73
    %p75 = scmp.ne.s32.totalorder %s66, %s67
    %p76 = scmp.eq.s32.totalorder %s14, 0
    %p77 = por %p75, %p76
    %p78 = scmp.ne.s32.totalorder %s66, %s67
    %p79 = scmp.eq.s32.totalorder %s15, 1
    %p80 = por %p78, %p79
    %p82 = scmp.ne.s32.totalorder %s67, %s81
    %p83 = scmp.eq.s32.totalorder %s15, 0
    %p84 = por %p82, %p83
    %s85 = ssub.s32 %s9, %s16
    %p86 = scmp.eq.s32.totalorder %s85, 0
    %s88 = sadd.s32 %s87, 1
    %s89 = scalar_select %p86, %s87, %s88
    %p92 = pneg %p86
    %p93 = scmp.eq.s32.totalorder %s9, 1
    %p94 = por %p92, %p93
    %p95 = scmp.ne.s32.totalorder %s87, %s90
    %p96 = scmp.eq.s32.totalorder %s9, 0
    %p97 = por %p95, %p96
    %p98 = scmp.ne.s32.totalorder %s87, %s90
    %p99 = scmp.eq.s32.totalorder %s14, 1
    %p100 = por %p98, %p99
    %p101 = scmp.ne.s32.totalorder %s90, %s91
    %p102 = scmp.eq.s32.totalorder %s14, 0
    %p103 = por %p101, %p102
    %p104 = scmp.ne.s32.totalorder %s90, %s91
    %p105 = scmp.eq.s32.totalorder %s15, 1
    %p106 = por %p104, %p105
    %p108 = scmp.ne.s32.totalorder %s91, %s107
    %p109 = scmp.eq.s32.totalorder %s15, 0
    %p110 = por %p108, %p109
    %p111 = scmp.le.s32.totalorder 1, %s9
    %p112 = scmp.lt.s32.totalorder %s9, 3
    %p113 = pnand %p111, %p112
    %p114 = pneg %p113
    // Predicated region
    $region9: #{tpu_custom_call.1} parent=5 // pred_check
      _
    $region10: #{tpu_custom_call.1} parent=5 // pred_check_branch
      %116 = sbr.rel (%p113) target = $region12
    $region11: #{tpu_custom_call.1} parent=5 // pred_region
      %s117 = ssub.s32 %s9, 1
      // Predicated region
      $region13: #{tpu_custom_call.1} parent=11 // pred_check
        %p118 = pneg %p56
      $region14: #{tpu_custom_call.1} parent=11 // pred_check_branch
        %120 = sbr.rel (%p118) target = $region16
      $region15: #{tpu_custom_call.1} parent=11 // pred_region
        _
      $region16: #{tpu_custom_call.1} parent=11 // pred_fallthru
        _
      // Predicated region
      $region17: #{tpu_custom_call.1} parent=11 // pred_check
        %p121 = pneg %p77
      $region18: #{tpu_custom_call.1} parent=11 // pred_check_branch
        %123 = sbr.rel (%p121) target = $region20
      $region19: #{tpu_custom_call.1} parent=11 // pred_region
        _
      $region20: #{tpu_custom_call.1} parent=11 // pred_fallthru
        _
    $region12: #{tpu_custom_call.1} parent=5 // pred_fallthru
      _
    %p124 = scmp.lt.s32.totalorder %s9, 2
    // Predicated region
    $region21: #{tpu_custom_call.1} parent=5 // pred_check
      %p125 = pneg %p124
    $region22: #{tpu_custom_call.1} parent=5 // pred_check_branch
      %127 = sbr.rel (%p125) target = $region24
    $region23: #{tpu_custom_call.1} parent=5 // pred_region
      // Predicated region
      $region25: #{tpu_custom_call.1} parent=23 // pred_check
        %p128 = pneg %p29
      $region26: #{tpu_custom_call.1} parent=23 // pred_check_branch
        %130 = sbr.rel (%p128) target = $region28
      $region27: #{tpu_custom_call.1} parent=23 // pred_region
        %s131 = smul.u32 4, %s9
        %p132 = scmp.lt.s32.totalorder %s131, 7
        %s133 = scalar_select %p132, %s131, 7
        %s134 = smul.addr %s133, 8
        %s135 = scalar_lea.vmem %s0, %s134
        %s136 = smul.u32 4, %s9
      $region28: #{tpu_custom_call.1} parent=23 // pred_fallthru
        _
    $region24: #{tpu_custom_call.1} parent=5 // pred_fallthru
      _
    %p137 = scmp.le.s32.totalorder 1, %s9
    %p138 = scmp.lt.s32.totalorder %s9, 3
    %p139 = pnand %p137, %p138
    %p140 = pneg %p139
    // Predicated region
    $region29: #{tpu_custom_call.1} parent=5 // pred_check
      _
    $region30: #{tpu_custom_call.1} parent=5 // pred_check_branch
      %142 = sbr.rel (%p139) target = $region32
    $region31: #{tpu_custom_call.1} parent=5 // pred_region
      %s143 = ssub.s32 %s9, 1
      %s144 = smul.u32 4, %s14
      %p145 = scmp.lt.s32.totalorder %s144, 7
      %s146 = scalar_select %p145, %s144, 7
      %s147 = smul.addr %s146, 8
      %s148 = scalar_lea.vmem %s0, %s147
      %p149 = pneg %p35
      %p150 = pneg %p32
      %p151 = pneg %p56
      %p152 = pneg %p53
      %p153 = pneg %p77
      %p154 = pneg %p74
      %p155 = pneg %p103
      %p156 = pneg %p100
      %s157 = smul.u32 4, %s14
      %p158 = scmp.lt.s32.totalorder %s157, 7
      %s159 = scalar_select %p158, %s157, 7
      %s160 = smul.addr %s159, 8
      %s161 = scalar_lea.vmem %s3, %s160
      %s162 = smul.u32 4, %s14
      %p163 = scmp.lt.s32.totalorder %s162, 7
      %s164 = scalar_select %p163, %s162, 7
      %s165 = smul.addr %s164, 8
      %s166 = scalar_lea.vmem %s0, %s165
      %s167 = smul.u32 4, %s14
      %s168 = smul.u32 4, %s14
      %p169 = scmp.lt.s32.totalorder %s168, 7
      %s170 = scalar_select %p169, %s168, 7
      %s171 = smul.addr %s170, 8
      %s172 = scalar_lea.vmem %s3, %s171
      %s173 = smul.u32 4, %s14
      %v174 = vld [vmem:[%s166] sm:$0xff]
      %v175 = vld [vmem:[%s166 + $0x8] sm:$0xff]
      %v176 = vld [vmem:[%s166 + $0x10] sm:$0xff]
      %v177 = vld [vmem:[%s166 + $0x18] sm:$0xff]
      %v178 = vmul.f32 %v174, %v174
      %v179 = vmul.f32 %v175, %v175
      %v180 = vmul.f32 %v176, %v176
      %v181 = vmul.f32 %v177, %v177
      %vm182 = vcmask 261120
      %v183 = vsel %vm182, %v178, 0.0
      %184 = vadd.xlane.f32.xlu0 %v183
      %v185 = vpop.xlane.xlu0 %184
      %v186 = vsel %vm182, %v179, 0.0
      %187 = vadd.xlane.f32.xlu0 %v186
      %v188 = vpop.xlane.xlu0 %187
      %v189 = vsel %vm182, %v180, 0.0
      %190 = vadd.xlane.f32.xlu0 %v189
      %v191 = vpop.xlane.xlu0 %190
      %v192 = vsel %vm182, %v181, 0.0
      %193 = vadd.xlane.f32.xlu0 %v192
      %v194 = vpop.xlane.xlu0 %193
      %v195 = vld [vmem:[%s1] sm:$0xff]
      %v196 = vld [vmem:[%s1 + $0x8] sm:$0xff]
      %v197 = vld [vmem:[%s1 + $0x10] sm:$0xff]
      %v198 = vld [vmem:[%s1 + $0x18] sm:$0xff]
      %v200 = vsel %vm182, %v174, 0
      %v203 = vsel %vm182, %v175, 0
      %v206 = vsel %vm182, %v176, 0
      %v209 = vsel %vm182, %v177, 0
      %211 = vmatpush.msra.mxu0 0.0
      %212 = vmatpush.msra.mxu0 0.0
      %213 = vmatpush.msra.mxu0 0.0
      %214 = vmatpush.msra.mxu0 0.0
      %215 = vmatpush.msra.mxu0 0.0
      %216 = vmatpush.msra.mxu0 0.0
      %217 = vmatpush.msra.mxu0 0.0
      %218 = vmatpush.msra.mxu0 0.0
      %219 = vmatpush.msra.mxu0 0.0
      %220 = vmatpush.msra.mxu0 0.0
      %221 = vmatpush.msra.mxu0 0.0
      %222 = vmatpush.msra.mxu0 0.0
      %223 = vmatpush.msra.mxu0 %v198
      %224 = vmatpush.msra.mxu0 %v197
      %225 = vmatpush.msra.mxu0 %v196
      %226 = vmatpush.msra.mxu0 %v195
      %227 = vmatmul.f32.gmra.mxu0 %v200
      %v228 = vpop.f32.mrf.mxu0
      %v229 = vadd.f32 0.0, %v228
      %230 = vmatmul.f32.gmra.mxu0 %v203
      %v231 = vpop.f32.mrf.mxu0
      %v232 = vadd.f32 0.0, %v231
      %233 = vmatmul.f32.gmra.mxu0 %v206
      %v234 = vpop.f32.mrf.mxu0
      %v235 = vadd.f32 0.0, %v234
      %236 = vmatmul.f32.gmra.mxu0 %v209
      %v237 = vpop.f32.mrf.mxu0
      %v238 = vadd.f32 0.0, %v237
      %239 = vdwg.mxu0
      %v240 = vld [vmem:[%s2] sm:$0x1]
      %v242 = vperm.slane %v240, 0
      %v244 = vadd.f32 %v185, %v242
      %v245 = vadd.f32 %v188, %v242
      %v246 = vadd.f32 %v191, %v242
      %v247 = vadd.f32 %v194, %v242
      %v248 = vmul.f32 %v229, 2.0
      %v249 = vmul.f32 %v232, 2.0
      %v250 = vmul.f32 %v235, 2.0
      %v251 = vmul.f32 %v238, 2.0
      %v252 = vsub.f32 %v244, %v248
      %v253 = vsub.f32 %v245, %v249
      %v254 = vsub.f32 %v246, %v250
      %v255 = vsub.f32 %v247, %v251
      %v256 = vmax.f32 %v252, 0.0
      %v257 = vmax.f32 %v253, 0.0
      %v258 = vmax.f32 %v254, 0.0
      %v259 = vmax.f32 %v255, 0.0
      %v260 = vadd.f32 %v256, 1.0
      %v261 = vadd.f32 %v257, 1.0
      %v262 = vadd.f32 %v258, 1.0
      %v263 = vadd.f32 %v259, 1.0
      %v264 = vrcp.pop %v260
      %v265 = vrcp.pop %v261
      %v266 = vrcp.pop %v262
      %v267 = vrcp.pop %v263
      %268 = vadd.xlane.f32.xlu0 %v264
      %v269 = vpop.xlane.xlu0 %268
      %270 = vadd.xlane.f32.xlu0 %v265
      %v271 = vpop.xlane.xlu0 %270
      %272 = vadd.xlane.f32.xlu0 %v266
      %v273 = vpop.xlane.xlu0 %272
      %274 = vadd.xlane.f32.xlu0 %v267
      %v275 = vpop.xlane.xlu0 %274
      %v276 = vrcp.pop %v269
      %v277 = vmul.f32 %v269, %v276
      %v278 = vsub.f32 1.0, %v277
      %v279 = vmul.f32 %v276, %v278
      %v280 = vadd.f32 %v276, %v279
      %vm281 = vweird.f32 %v269
      %vm282 = vweird.f32 %v276
      %vm283 = vmor %vm281, %vm282
      %v284 = vsel %vm283, %v276, %v280
      %v285 = vand.u32 2147483647, %v269
      %vm286 = vcmp.eq.f32.partialorder %v285, 8.507059e+37
      %v287 = vand.u32 %v269, 2147483648
      %v288 = vor.u32 1.1754944e-38, %v287
      %v289 = vsel %vm286, %v288, %v284
      %v290 = vmul.f32 %v264, %v289
      %v291 = vrcp.pop %v271
      %v292 = vmul.f32 %v271, %v291
      %v293 = vsub.f32 1.0, %v292
      %v294 = vmul.f32 %v291, %v293
      %v295 = vadd.f32 %v291, %v294
      %vm296 = vweird.f32 %v271
      %vm297 = vweird.f32 %v291
      %vm298 = vmor %vm296, %vm297
      %v299 = vsel %vm298, %v291, %v295
      %v300 = vand.u32 2147483647, %v271
      %vm301 = vcmp.eq.f32.partialorder %v300, 8.507059e+37
      %v302 = vand.u32 %v271, 2147483648
      %v303 = vor.u32 1.1754944e-38, %v302
      %v304 = vsel %vm301, %v303, %v299
      %v305 = vmul.f32 %v265, %v304
      %v306 = vrcp.pop %v273
      %v307 = vmul.f32 %v273, %v306
      %v308 = vsub.f32 1.0, %v307
      %v309 = vmul.f32 %v306, %v308
      %v310 = vadd.f32 %v306, %v309
      %vm311 = vweird.f32 %v273
      %vm312 = vweird.f32 %v306
      %vm313 = vmor %vm311, %vm312
      %v314 = vsel %vm313, %v306, %v310
      %v315 = vand.u32 2147483647, %v273
      %vm316 = vcmp.eq.f32.partialorder %v315, 8.507059e+37
      %v317 = vand.u32 %v273, 2147483648
      %v318 = vor.u32 1.1754944e-38, %v317
      %v319 = vsel %vm316, %v318, %v314
      %v320 = vmul.f32 %v266, %v319
      %v321 = vrcp.pop %v275
      %v322 = vmul.f32 %v275, %v321
      %v323 = vsub.f32 1.0, %v322
      %v324 = vmul.f32 %v321, %v323
      %v325 = vadd.f32 %v321, %v324
      %vm326 = vweird.f32 %v275
      %vm327 = vweird.f32 %v321
      %vm328 = vmor %vm326, %vm327
      %v329 = vsel %vm328, %v321, %v325
      %v330 = vand.u32 2147483647, %v275
      %vm331 = vcmp.eq.f32.partialorder %v330, 8.507059e+37
      %v332 = vand.u32 %v275, 2147483648
      %v333 = vor.u32 1.1754944e-38, %v332
      %v334 = vsel %vm331, %v333, %v329
      %v335 = vmul.f32 %v267, %v334
      %vm336 = vcmask 64512
      %337 = vst.msk [vmem:[%s172] sm:$0xff] %vm336, %v290
      %338 = vst.msk [vmem:[%s172 + $0x8] sm:$0xff] %vm336, %v305
      %339 = vst.msk [vmem:[%s172 + $0x10] sm:$0xff] %vm336, %v320
      %340 = vst.msk [vmem:[%s172 + $0x18] sm:$0xff] %vm336, %v335
      %s341 = smul.u32 4, %s14
      %p342 = scmp.lt.s32.totalorder %s341, 7
      %s343 = scalar_select %p342, %s341, 7
      %s344 = smul.addr %s343, 8
      %s345 = scalar_lea.vmem %s3, %s344
      // Predicated region
      $region33: #{tpu_custom_call.1} parent=31 // pred_check
        %p346 = pneg %p100
      $region34: #{tpu_custom_call.1} parent=31 // pred_check_branch
        %348 = sbr.rel (%p346) target = $region36
      $region35: #{tpu_custom_call.1} parent=31 // pred_region
        %s349 = smul.u32 4, %s14
      $region36: #{tpu_custom_call.1} parent=31 // pred_fallthru
        _
    $region32: #{tpu_custom_call.1} parent=5 // pred_fallthru
      _
    %p350 = scmp.le.s32.totalorder 2, %s9
    // Predicated region
    $region37: #{tpu_custom_call.1} parent=5 // pred_check
      %p351 = pneg %p350
    $region38: #{tpu_custom_call.1} parent=5 // pred_check_branch
      %353 = sbr.rel (%p351) target = $region40
    $region39: #{tpu_custom_call.1} parent=5 // pred_region
      %s354 = ssub.s32 %s9, 2
      // Predicated region
      $region41: #{tpu_custom_call.1} parent=39 // pred_check
        %p355 = pneg %p106
      $region42: #{tpu_custom_call.1} parent=39 // pred_check_branch
        %357 = sbr.rel (%p355) target = $region44
      $region43: #{tpu_custom_call.1} parent=39 // pred_region
        %s358 = smul.u32 4, %s15
        %p359 = scmp.lt.s32.totalorder %s358, 7
        %s360 = scalar_select %p359, %s358, 7
        %s361 = smul.addr %s360, 8
        %s362 = scalar_lea.vmem %s3, %s361
      $region44: #{tpu_custom_call.1} parent=39 // pred_fallthru
        _
    $region40: #{tpu_custom_call.1} parent=5 // pred_fallthru
      _
  $region6: #{tpu_custom_call.1} parent=0 // loop_footer
    %s13 = sadd.s32 1, %s9
  $region7: #{tpu_custom_call.1} parent=0 // loop_footer_branch
    %8 = sbr.rel target = $region3
  $region8: #{tpu_custom_call.1} parent=0 // loop_exit
    _

</llo_original>
